<compile_context>
chip_gen: v7x
topology: tpu7x:2x2x1
jax: 0.10.0
libtpu: 0.0.40
codegen_flags: <defaults>
</compile_context>

<pallas_src>
import functools

import jax
import jax.numpy as jnp
from jax.experimental import pallas as pl
from jax.experimental.pallas import tpu as pltpu


def _round_up(x, m):
    return (x + m - 1) // m * m


_TM_CANDIDATES = (1024, 512, 256, 128)
_TK_CANDIDATES = (512, 256, 128)
_FULL_K_MAX = 2048            # single-reduction-step (full-K block) up to here
_VMEM_LIMIT = 32 * 1024 * 1024


def _pick_tm(rows):
    """Largest row tile whose zero-row padding waste stays bounded (<=25%)."""
    cap = max(_round_up(rows, 128), int(rows * 1.25))
    for c in _TM_CANDIDATES:
        if _round_up(rows, c) <= cap:
            return c
    return 128


def _largest_divisor(dim, candidates):
    for c in candidates:
        if dim % c == 0:
            return c
    return 128


def _mosaic(*sem):
    return pltpu.CompilerParams(dimension_semantics=sem,
                                vmem_limit_bytes=_VMEM_LIMIT)


# ---------------------------------------------------------------------------
# In-kernel helpers
# ---------------------------------------------------------------------------
def _row_stats(y):
    """Per-channel (sum, sum-of-squares) over the row axis of an f32 tile.

    Padded rows are exact zeros, so they contribute nothing.
    # TODO(synk): offload the cross-sublane reduction to the MXU (ones-row
    # matmul) -- minor; only matters once HBM traffic no longer dominates.
    """
    s = jnp.sum(y, axis=0, keepdims=True)
    sq = jnp.sum(y * y, axis=0, keepdims=True)
    return jnp.concatenate([s, sq], axis=0)[None]          # (1, 2, tn)


def _lrelu(x):
    return jnp.where(x > 0, x, 0.2 * x)


# ---------------------------------------------------------------------------
# Pallas kernels -- num_k == 1 specializations (no scratch, no pl.when)
# ---------------------------------------------------------------------------
def _stats_kernel(p_ref, w_ref, stats_ref):
    """Pass 1 of the recompute path: matmul + BN partial stats, y discarded."""
    y = jnp.dot(p_ref[...], w_ref[...], preferred_element_type=jnp.float32)
    stats_ref[...] = _row_stats(y)


def _conv_bn_act_kernel(p_ref, w_ref, scale_ref, shift_ref, o_ref):
    """Pass 2 of the recompute path: matmul fused with BN apply + LeakyReLU."""
    y = jnp.dot(p_ref[...], w_ref[...], preferred_element_type=jnp.float32)
    o_ref[...] = _lrelu(y * scale_ref[...] + shift_ref[...]).astype(o_ref.dtype)


def _conv_y_stats_kernel(p_ref, w_ref, y_ref, stats_ref):
    """Large-K path, num_k == 1: matmul -> bf16 y + BN partial stats."""
    y = jnp.dot(p_ref[...], w_ref[...], preferred_element_type=jnp.float32)
    y_ref[...] = y.astype(y_ref.dtype)
    stats_ref[...] = _row_stats(y)


def _conv_bias_kernel(p_ref, w_ref, b_ref, o_ref):
    """is_last_block path, num_k == 1: matmul + bias."""
    y = jnp.dot(p_ref[...], w_ref[...], preferred_element_type=jnp.float32)
    o_ref[...] = (y + b_ref[...]).astype(o_ref.dtype)


# ---------------------------------------------------------------------------
# Pallas kernels -- k-tiled (kdim > _FULL_K_MAX): f32 VMEM accumulator
# ---------------------------------------------------------------------------
def _conv_y_stats_acc_kernel(p_ref, w_ref, y_ref, stats_ref, acc_ref):
    k = pl.program_id(2)

    @pl.when(k == 0)
    def _():
        acc_ref[...] = jnp.zeros_like(acc_ref)

    acc_ref[...] += jnp.dot(p_ref[...], w_ref[...],
                            preferred_element_type=jnp.float32)

    @pl.when(k == pl.num_programs(2) - 1)
    def _():
        y = acc_ref[...]
        y_ref[...] = y.astype(y_ref.dtype)
        stats_ref[...] = _row_stats(y)


def _conv_bias_acc_kernel(p_ref, w_ref, b_ref, o_ref, acc_ref):
    k = pl.program_id(2)

    @pl.when(k == 0)
    def _():
        acc_ref[...] = jnp.zeros_like(acc_ref)

    acc_ref[...] += jnp.dot(p_ref[...], w_ref[...],
                            preferred_element_type=jnp.float32)

    @pl.when(k == pl.num_programs(2) - 1)
    def _():
        o_ref[...] = (acc_ref[...] + b_ref[...]).astype(o_ref.dtype)


# ---------------------------------------------------------------------------
# Pallas kernel -- elementwise BN apply + LeakyReLU (large-K path, pass 2)
# ---------------------------------------------------------------------------
def _bn_act_kernel(y_ref, scale_ref, shift_ref, o_ref):
    xn = y_ref[...].astype(jnp.float32) * scale_ref[...] + shift_ref[...]
    o_ref[...] = _lrelu(xn).astype(o_ref.dtype)


# ---------------------------------------------------------------------------
# Wrapper
# ---------------------------------------------------------------------------
@functools.partial(
    jax.jit,
    static_argnames=("k_size", "stride", "is_last_block", "compute_dtype"))
def disc_block_forward(x, weight, bias, gamma, beta, k_size=4, stride=2,
                       is_last_block=False, compute_dtype=jnp.bfloat16):
    """Forward pass of DiscBlock.

    x:      (N, C_in, H, W)      NCHW (PyTorch layout)
    weight: (C_out, C_in, k, k)  PyTorch Conv2d layout
    bias:   (C_out,)
    gamma:  (C_out,)  BatchNorm2d weight
    beta:   (C_out,)  BatchNorm2d bias
    returns (N, C_out, OH, OW)   NCHW, x.dtype
    """
    n, c_in, h, w = x.shape
    c_out = weight.shape[0]
    oh = (h - k_size) // stride + 1
    ow = (w - k_size) // stride + 1
    rows = n * oh * ow
    kdim = c_in * k_size * k_size
    out_dtype = x.dtype        # keep NCHW/x.dtype output to match the module;
                               # when chaining blocks keep NHWC/bf16 instead.

    # ---- static tiling decisions ----
    c_pad = _round_up(c_out, 128)
    tn = 512 if c_pad % 512 == 0 else (256 if c_pad % 256 == 0 else 128)
    num_n = c_pad // tn
    tm = _pick_tm(rows)
    rows_pad = _round_up(rows, tm)
    num_m = rows_pad // tm

    if kdim <= _FULL_K_MAX:
        k_pad, tk, num_k = kdim, kdim, 1        # full-K block: no zero pad
    else:
        k_pad = _round_up(kdim, 128)
        tk = _largest_divisor(k_pad, _TK_CANDIDATES)
        num_k = k_pad // tk

    bpe = jnp.dtype(compute_dtype).itemsize

    # ---- im2col: the only HBM materialization of the patch matrix.  Cast to
    # the MXU dtype FIRST and fold the padding into the same producer so the
    # (k*k/s*s)x-duplicated matrix hits HBM exactly once, already narrow. ----
    # TODO(synk): stream the k*k taps inside the kernel (space-to-depth +
    # shifted-window DMA) so the patch matrix is never materialized at all.
    patches = jax.lax.conv_general_dilated_patches(
        x.astype(compute_dtype), (k_size, k_size), (stride, stride), "VALID",
        dimension_numbers=("NCHW", "OIHW", "NHWC"),   # feature order (C_in, kh, kw)
    ).reshape(rows, kdim)
    patches_p = jnp.pad(patches, ((0, rows_pad - rows), (0, k_pad - kdim)))

    w_mat = weight.reshape(c_out, kdim).T.astype(compute_dtype)   # (K, C_out)
    w_p = jnp.pad(w_mat, ((0, k_pad - kdim), (0, c_pad - c_out)))

    mm_cost = pl.CostEstimate(
        flops=2 * rows_pad * k_pad * c_pad, transcendentals=0,
        bytes_accessed=(rows_pad * k_pad * bpe + k_pad * c_pad * bpe
                        + rows_pad * c_pad * 4))

    # common BlockSpecs
    p_spec2 = pl.BlockSpec((tm, tk), lambda i, j: (i, 0))
    w_spec2 = pl.BlockSpec((tk, tn), lambda i, j: (0, j))
    vec_spec2 = pl.BlockSpec((1, tn), lambda i, j: (0, j))
    o_spec2 = pl.BlockSpec((tm, tn), lambda i, j: (i, j))
    p_spec3 = pl.BlockSpec((tm, tk), lambda i, j, k: (i, k))
    w_spec3 = pl.BlockSpec((tk, tn), lambda i, j, k: (k, j))

    # ----------------------------------------------------------------- last
    if is_last_block:
        b_p = jnp.pad(bias.astype(jnp.float32),
                      (0, c_pad - c_out)).reshape(1, c_pad)
        if num_k == 1:
            out_flat = pl.pallas_call(
                _conv_bias_kernel,
                out_shape=jax.ShapeDtypeStruct((rows_pad, c_pad), out_dtype),
                grid_spec=pltpu.PrefetchScalarGridSpec(
                    num_scalar_prefetch=0, grid=(num_m, num_n),
                    in_specs=[p_spec2, w_spec2, vec_spec2],
                    out_specs=o_spec2),
                compiler_params=_mosaic("parallel", "parallel"),
                cost_estimate=mm_cost,
            )(patches_p, w_p, b_p)
        else:
            out_flat = pl.pallas_call(
                _conv_bias_acc_kernel,
                out_shape=jax.ShapeDtypeStruct((rows_pad, c_pad), out_dtype),
                grid_spec=pltpu.PrefetchScalarGridSpec(
                    num_scalar_prefetch=0, grid=(num_m, num_n, num_k),
                    in_specs=[p_spec3, w_spec3,
                              pl.BlockSpec((1, tn), lambda i, j, k: (0, j))],
                    out_specs=pl.BlockSpec((tm, tn), lambda i, j, k: (i, j)),
                    scratch_shapes=[pltpu.VMEM((tm, tn), jnp.float32)]),
                compiler_params=_mosaic("parallel", "parallel", "arbitrary"),
                cost_estimate=mm_cost,
            )(patches_p, w_p, b_p)
        out = out_flat[:rows, :c_out].reshape(n, oh, ow, c_out)
        return out.transpose(0, 3, 1, 2)

    # -------------------------------------------------------- conv+BN+LReLU
    stats_shape = jax.ShapeDtypeStruct((num_m, 2, c_pad), jnp.float32)
    stats_spec2 = pl.BlockSpec((1, 2, tn), lambda i, j: (i, 0, j))

    # Recompute the conv in pass 2 when re-reading the (small-K) patches is
    # cheaper than writing + re-reading a bf16 y intermediate.
    recompute = (num_k == 1) and (kdim * bpe <= 4 * c_pad)

    if recompute:
        # ---- pass 1: matmul + BN partial stats only (y never hits HBM) ----
        stats = pl.pallas_call(
            _stats_kernel,
            out_shape=stats_shape,
            grid_spec=pltpu.PrefetchScalarGridSpec(
                num_scalar_prefetch=0, grid=(num_m, num_n),
                in_specs=[p_spec2, w_spec2],
                out_specs=stats_spec2),
            compiler_params=_mosaic("parallel", "parallel"),
            cost_estimate=mm_cost,
        )(patches_p, w_p)
        y_flat = None
    elif num_k == 1:
        y_flat, stats = pl.pallas_call(
            _conv_y_stats_kernel,
            out_shape=(jax.ShapeDtypeStruct((rows_pad, c_pad), jnp.bfloat16),
                       stats_shape),
            grid_spec=pltpu.PrefetchScalarGridSpec(
                num_scalar_prefetch=0, grid=(num_m, num_n),
                in_specs=[p_spec2, w_spec2],
                out_specs=(o_spec2, stats_spec2)),
            compiler_params=_mosaic("parallel", "parallel"),
            cost_estimate=mm_cost,
        )(patches_p, w_p)
    else:
        y_flat, stats = pl.pallas_call(
            _conv_y_stats_acc_kernel,
            out_shape=(jax.ShapeDtypeStruct((rows_pad, c_pad), jnp.bfloat16),
                       stats_shape),
            grid_spec=pltpu.PrefetchScalarGridSpec(
                num_scalar_prefetch=0, grid=(num_m, num_n, num_k),
                in_specs=[p_spec3, w_spec3],
                out_specs=(pl.BlockSpec((tm, tn), lambda i, j, k: (i, j)),
                           pl.BlockSpec((1, 2, tn), lambda i, j, k: (i, 0, j))),
                scratch_shapes=[pltpu.VMEM((tm, tn), jnp.float32)]),
            compiler_params=_mosaic("parallel", "parallel", "arbitrary"),
            cost_estimate=mm_cost,
        )(patches_p, w_p)

    # ---- tiny JAX glue: partial stats -> per-channel scale/shift ----
    # Padded rows are exact zeros; divide by the true row count.  Biased
    # variance (PyTorch train-mode BatchNorm2d), clamped against E[x^2]-E[x]^2
    # cancellation (acceptable here since post-conv activations are ~zero-mean).
    total = jnp.sum(stats, axis=0)                          # (2, c_pad)
    inv_count = 1.0 / float(rows)
    mean = total[0] * inv_count
    var = jnp.maximum(total[1] * inv_count - mean * mean, 0.0)
    inv_std = jax.lax.rsqrt(var + 1e-5)
    gamma_p = jnp.pad(gamma.astype(jnp.float32), (0, c_pad - c_out))
    beta_p = jnp.pad(beta.astype(jnp.float32), (0, c_pad - c_out))
    scale = (gamma_p * inv_std).reshape(1, c_pad)
    shift = (beta_p - mean * gamma_p * inv_std).reshape(1, c_pad)

    if recompute:
        # ---- pass 2: matmul again, fused with BN apply + LeakyReLU ----
        out_flat = pl.pallas_call(
            _conv_bn_act_kernel,
            out_shape=jax.ShapeDtypeStruct((rows_pad, c_pad), out_dtype),
            grid_spec=pltpu.PrefetchScalarGridSpec(
                num_scalar_prefetch=0, grid=(num_m, num_n),
                in_specs=[p_spec2, w_spec2, vec_spec2, vec_spec2],
                out_specs=o_spec2),
            compiler_params=_mosaic("parallel", "parallel"),
            cost_estimate=mm_cost,
        )(patches_p, w_p, scale, shift)
    else:
        # ---- pass 2: pure HBM-roofline elementwise pass, big lane-dense tiles
        tm2 = _largest_divisor(rows_pad, _TM_CANDIDATES)
        out_flat = pl.pallas_call(
            _bn_act_kernel,
            out_shape=jax.ShapeDtypeStruct((rows_pad, c_pad), out_dtype),
            grid_spec=pltpu.PrefetchScalarGridSpec(
                num_scalar_prefetch=0, grid=(rows_pad // tm2,),
                in_specs=[pl.BlockSpec((tm2, c_pad), lambda i: (i, 0)),
                          pl.BlockSpec((1, c_pad), lambda i: (0, 0)),
                          pl.BlockSpec((1, c_pad), lambda i: (0, 0))],
                out_specs=pl.BlockSpec((tm2, c_pad), lambda i: (i, 0))),
            compiler_params=_mosaic("parallel"),
        )(y_flat, scale, shift)

    # (rows, C_out) is NHWC-flat; slice padding, back to NCHW for the module
    # boundary.  (When chaining DiscBlocks keep NHWC and skip this transpose.)
    out = out_flat[:rows, :c_out].reshape(n, oh, ow, c_out)
    return out.transpose(0, 3, 1, 2)


# ---------------------------------------------------------------------------
# Pure-JAX reference for verification
# ---------------------------------------------------------------------------
def _reference(x, weight, bias, gamma, beta, stride, is_last_block):
    y = jax.lax.conv_general_dilated(
        x, weight, window_strides=(stride, stride), padding="VALID",
        dimension_numbers=("NCHW", "OIHW", "NCHW"),
    ) + bias.reshape(1, -1, 1, 1)
    if is_last_block:
        return y
    mean = jnp.mean(y, axis=(0, 2, 3), keepdims=True)
    var = jnp.mean((y - mean) ** 2, axis=(0, 2, 3), keepdims=True)
    xn = (y - mean) * jax.lax.rsqrt(var + 1e-5)
    xn = xn * gamma.reshape(1, -1, 1, 1) + beta.reshape(1, -1, 1, 1)
    return jnp.where(xn > 0, xn, 0.2 * xn)


def _make_inputs(key, n, c_in, hw, c_out, k):
    k_x, k_w, k_b, k_g, k_bt = jax.random.split(key, 5)
    x = jax.random.normal(k_x, (n, c_in, hw, hw), jnp.float32)
    weight = jax.random.normal(k_w, (c_out, c_in, k, k), jnp.float32) * 0.05
    bias = jax.random.normal(k_b, (c_out,), jnp.float32) * 0.05
    gamma = 1.0 + 0.1 * jax.random.normal(k_g, (c_out,), jnp.float32)
    beta = 0.1 * jax.random.normal(k_bt, (c_out,), jnp.float32)
    return x, weight, bias, gamma, beta


# ---------------------------------------------------------------------------
if __name__ == "__main__":
    key = jax.random.PRNGKey(0)
    K, STRIDE = 4, 2

    # --- DiscBlock(4 -> 8): recompute path (kdim=64, num_k=1), bf16 MXU ---
    x, wgt, b, g, bt = _make_inputs(key, 2, 4, 16, 8, K)
    out = jax.block_until_ready(
        disc_block_forward(x, wgt, b, g, bt, k_size=K, stride=STRIDE))
    ref = _reference(x, wgt, b, g, bt, STRIDE, False)
    assert out.shape == (2, 8, 7, 7), out.shape
    assert jnp.allclose(out, ref, atol=5e-2, rtol=5e-2), "bf16 recompute mismatch"

    # --- same block, f32 compute: tight-tolerance correctness check ---
    out_f32 = jax.block_until_ready(
        disc_block_forward(x, wgt, b, g, bt, k_size=K, stride=STRIDE,
                           compute_dtype=jnp.float32))
    assert jnp.allclose(out_f32, ref, atol=1e-4, rtol=1e-4), "f32 mismatch"

    # --- last-block variant (conv + bias only, num_k=1) ---
    out_last = jax.block_until_ready(
        disc_block_forward(x, wgt, b, g, bt, k_size=K, stride=STRIDE,
                           is_last_block=True))
    ref_last = _reference(x, wgt, b, g, bt, STRIDE, True)
    assert jnp.allclose(out_last, ref_last, atol=5e-2, rtol=5e-2), \
        "mismatch (last block)"

    # --- larger-K block: bf16-y intermediate path (num_k=1, no recompute) ---
    x2, w2, b2, g2, bt2 = _make_inputs(jax.random.PRNGKey(1), 2, 40, 12, 8, K)
    out2 = jax.block_until_ready(
        disc_block_forward(x2, w2, b2, g2, bt2, k_size=K, stride=STRIDE))
    ref2 = _reference(x2, w2, b2, g2, bt2, STRIDE, False)
    assert jnp.allclose(out2, ref2, atol=5e-2, rtol=5e-2), "y-path mismatch"

    # --- very large K: k-tiled accumulator kernels (num_k > 1) ---
    x3, w3, b3, g3, bt3 = _make_inputs(jax.random.PRNGKey(2), 2, 160, 6, 8, K)
    out3 = jax.block_until_ready(
        disc_block_forward(x3, w3, b3, g3, bt3, k_size=K, stride=STRIDE))
    ref3 = _reference(x3, w3, b3, g3, bt3, STRIDE, False)
    assert jnp.allclose(out3, ref3, atol=5e-2, rtol=5e-2), "acc-path mismatch"

    out3l = jax.block_until_ready(
        disc_block_forward(x3, w3, b3, g3, bt3, k_size=K, stride=STRIDE,
                           is_last_block=True))
    ref3l = _reference(x3, w3, b3, g3, bt3, STRIDE, True)
    assert jnp.allclose(out3l, ref3l, atol=5e-2, rtol=5e-2), \
        "acc-path mismatch (last block)"

    print("KERNEL_OK")
</pallas_src>

<mosaic_0001>
module attributes {stable_mosaic.version = 11 : i64} {
  func.func @_stats_kernel(%arg0: i32, %arg1: i32, %arg2: memref<128x64xbf16, #tpu.memory_space<vmem>>, %arg3: memref<64x128xbf16, #tpu.memory_space<vmem>>, %arg4: memref<1x2x128xf32, #tpu.memory_space<vmem>>) attributes {dimension_semantics = [#tpu.dimension_semantics<parallel>, #tpu.dimension_semantics<parallel>], iteration_bounds = array<i64: 1, 1>, scalar_prefetch = 0 : i64, scratch_operands = 0 : i64, tpu.core_type = #tpu.core_type<tc>, window_params = [{transform_indices = @transform_0, window_bounds = array<i64: 128, 64>}, {transform_indices = @transform_1, window_bounds = array<i64: 64, 128>}, {transform_indices = @transform_2, window_bounds = array<i64: 1, 2, 128>}]} {
    %c0 = arith.constant 0 : index
    %c0_0 = arith.constant 0 : index
    %0 = vector.load %arg2[%c0, %c0_0] : memref<128x64xbf16, #tpu.memory_space<vmem>>, vector<128x64xbf16>
    %c0_1 = arith.constant 0 : index
    %c0_2 = arith.constant 0 : index
    %1 = vector.load %arg3[%c0_1, %c0_2] : memref<64x128xbf16, #tpu.memory_space<vmem>>, vector<64x128xbf16>
    %cst = arith.constant dense<0.000000e+00> : vector<128x128xf32>
    %2 = tpu.matmul %0, %1, %cst {dimension_numbers = #tpu.dot_dimension_numbers<[1], [0], [0], [1], [0, 0, 1, 1], [], []>} : vector<128x64xbf16>, vector<64x128xbf16>, vector<128x128xf32> -> vector<128x128xf32>
    %cst_3 = arith.constant dense<0.000000e+00> : vector<128xf32>
    %3 = vector.multi_reduction <add>, %2, %cst_3 [0] : vector<128x128xf32> to vector<128xf32>
    %4 = vector.shape_cast %3 : vector<128xf32> to vector<1x128xf32>
    %5 = arith.mulf %2, %2 : vector<128x128xf32>
    %cst_4 = arith.constant dense<0.000000e+00> : vector<128xf32>
    %6 = vector.multi_reduction <add>, %5, %cst_4 [0] : vector<128x128xf32> to vector<128xf32>
    %7 = vector.shape_cast %6 : vector<128xf32> to vector<1x128xf32>
    %8 = tpu.concatenate %4, %7 in 0 : vector<1x128xf32>, vector<1x128xf32> -> vector<2x128xf32>
    %9 = vector.shape_cast %8 : vector<2x128xf32> to vector<1x2x128xf32>
    %c0_5 = arith.constant 0 : index
    %c0_6 = arith.constant 0 : index
    %c0_7 = arith.constant 0 : index
    %10 = vector.load %arg4[%c0_5, %c0_6, %c0_7] : memref<1x2x128xf32, #tpu.memory_space<vmem>>, vector<1x2x128xf32>
    tpu.vector_store %arg4[%c0_5, %c0_6, %c0_7], %9 {strides = array<i32>} : memref<1x2x128xf32, #tpu.memory_space<vmem>>, vector<1x2x128xf32>,
    return
  }
  func.func @transform_0(%arg0: i32, %arg1: i32) -> (i32, i32) {
    %c0_i32 = arith.constant 0 : i32
    %c0_i32_0 = arith.constant 0 : i32
    return %arg0, %c0_i32 : i32, i32
  }
  func.func @transform_1(%arg0: i32, %arg1: i32) -> (i32, i32) {
    %c0_i32 = arith.constant 0 : i32
    %c0_i32_0 = arith.constant 0 : i32
    return %c0_i32, %arg1 : i32, i32
  }
  func.func @transform_2(%arg0: i32, %arg1: i32) -> (i32, i32, i32) {
    %c0_i32 = arith.constant 0 : i32
    %c0_i32_0 = arith.constant 0 : i32
    return %arg0, %c0_i32, %arg1 : i32, i32, i32
  }
}

module attributes {stable_mosaic.version = 11 : i64} {
  func.func @_conv_bn_act_kernel(%arg0: i32, %arg1: i32, %arg2: memref<128x64xbf16, #tpu.memory_space<vmem>>, %arg3: memref<64x128xbf16, #tpu.memory_space<vmem>>, %arg4: memref<1x128xf32, #tpu.memory_space<vmem>>, %arg5: memref<1x128xf32, #tpu.memory_space<vmem>>, %arg6: memref<128x128xf32, #tpu.memory_space<vmem>>) attributes {dimension_semantics = [#tpu.dimension_semantics<parallel>, #tpu.dimension_semantics<parallel>], iteration_bounds = array<i64: 1, 1>, scalar_prefetch = 0 : i64, scratch_operands = 0 : i64, tpu.core_type = #tpu.core_type<tc>, window_params = [{transform_indices = @transform_0, window_bounds = array<i64: 128, 64>}, {transform_indices = @transform_1, window_bounds = array<i64: 64, 128>}, {transform_indices = @transform_2, window_bounds = array<i64: 1, 128>}, {transform_indices = @transform_3, window_bounds = array<i64: 1, 128>}, {transform_indices = @transform_4, window_bounds = array<i64: 128, 128>}]} {
    %c0 = arith.constant 0 : index
    %c0_0 = arith.constant 0 : index
    %0 = vector.load %arg2[%c0, %c0_0] : memref<128x64xbf16, #tpu.memory_space<vmem>>, vector<128x64xbf16>
    %c0_1 = arith.constant 0 : index
    %c0_2 = arith.constant 0 : index
    %1 = vector.load %arg3[%c0_1, %c0_2] : memref<64x128xbf16, #tpu.memory_space<vmem>>, vector<64x128xbf16>
    %cst = arith.constant dense<0.000000e+00> : vector<128x128xf32>
    %2 = tpu.matmul %0, %1, %cst {dimension_numbers = #tpu.dot_dimension_numbers<[1], [0], [0], [1], [0, 0, 1, 1], [], []>} : vector<128x64xbf16>, vector<64x128xbf16>, vector<128x128xf32> -> vector<128x128xf32>
    %c0_3 = arith.constant 0 : index
    %c0_4 = arith.constant 0 : index
    %3 = vector.load %arg4[%c0_3, %c0_4] : memref<1x128xf32, #tpu.memory_space<vmem>>, vector<1x128xf32>
    %4 = vector.broadcast %3 : vector<1x128xf32> to vector<128x128xf32>
    %5 = arith.mulf %2, %4 : vector<128x128xf32>
    %c0_5 = arith.constant 0 : index
    %c0_6 = arith.constant 0 : index
    %6 = vector.load %arg5[%c0_5, %c0_6] : memref<1x128xf32, #tpu.memory_space<vmem>>, vector<1x128xf32>
    %7 = vector.broadcast %6 : vector<1x128xf32> to vector<128x128xf32>
    %8 = arith.addf %5, %7 : vector<128x128xf32>
    %cst_7 = arith.constant 0.000000e+00 : f32
    %9 = vector.broadcast %cst_7 : f32 to vector<128x128xf32>
    %10 = arith.cmpf ogt, %8, %9 : vector<128x128xf32>
    %cst_8 = arith.constant 2.000000e-01 : f32
    %11 = vector.broadcast %cst_8 : f32 to vector<128x128xf32>
    %12 = arith.mulf %11, %8 : vector<128x128xf32>
    %13 = arith.select %10, %8, %12 : vector<128x128xi1>, vector<128x128xf32>
    %c0_9 = arith.constant 0 : index
    %c0_10 = arith.constant 0 : index
    %14 = vector.load %arg6[%c0_9, %c0_10] : memref<128x128xf32, #tpu.memory_space<vmem>>, vector<128x128xf32>
    tpu.vector_store %arg6[%c0_9, %c0_10], %13 {strides = array<i32>} : memref<128x128xf32, #tpu.memory_space<vmem>>, vector<128x128xf32>,
    return
  }
  func.func @transform_0(%arg0: i32, %arg1: i32) -> (i32, i32) {
    %c0_i32 = arith.constant 0 : i32
    %c0_i32_0 = arith.constant 0 : i32
    return %arg0, %c0_i32 : i32, i32
  }
  func.func @transform_1(%arg0: i32, %arg1: i32) -> (i32, i32) {
    %c0_i32 = arith.constant 0 : i32
    %c0_i32_0 = arith.constant 0 : i32
    return %c0_i32, %arg1 : i32, i32
  }
  func.func @transform_2(%arg0: i32, %arg1: i32) -> (i32, i32) {
    %c0_i32 = arith.constant 0 : i32
    %c0_i32_0 = arith.constant 0 : i32
    return %c0_i32, %arg1 : i32, i32
  }
  func.func @transform_3(%arg0: i32, %arg1: i32) -> (i32, i32) {
    %c0_i32 = arith.constant 0 : i32
    %c0_i32_0 = arith.constant 0 : i32
    return %c0_i32, %arg1 : i32, i32
  }
  func.func @transform_4(%arg0: i32, %arg1: i32) -> (i32, i32) {
    %c0_i32 = arith.constant 0 : i32
    return %arg0, %arg1 : i32, i32
  }
}

</mosaic_0001>

<llo_original>
// kernel: disc_block_forward.3
$region0: #{disc_block_forward.3}
  #allocation0 [shape = 'u32[]', space=smem, size = 0x4, offset = 0x4, fixed_abs, tag = 'smem constant byte address 0x4 - core index']
  #allocation1 [shape = 'u32[144,128]{1,0:T(1,128)}', space=vmem, size = 0x12000, scoped, tag = 'internal scratch']
  %s0 = inlined_call_operand.vmem [shape: bf16[128,64], index: 0, kind: input, shape index: {}]
  %s1 = inlined_call_operand.vmem [shape: bf16[64,128], index: 1, kind: input, shape index: {}]
  %s2 = inlined_call_operand.vmem [shape: f32[1,128], index: 2, kind: input, shape index: {}]
  %s3 = inlined_call_operand.vmem [shape: f32[1,128], index: 3, kind: input, shape index: {}]
  %s4 = inlined_call_operand.vmem [shape: f32[128,128], index: 4, kind: output, shape index: {}]
  %s5 = sld [smem:[#allocation0]]
  $region26: #{disc_block_forward.3} parent=0
    _
  %s7 = ssub.s32 1, %s5
  %s8 = scalar_select 0, %s7, %s5
  // Predicated region
  $region2: #{disc_block_forward.3} parent=0 // pred_check
    _
  $region3: #{disc_block_forward.3} parent=0 // pred_check_branch
    %10 = sbr.rel (0) target = $region5
  $region4: #{disc_block_forward.3} parent=0 // pred_region
    _
  $region5: #{disc_block_forward.3} parent=0 // pred_fallthru
    _
  // Predicated region
  $region6: #{disc_block_forward.3} parent=0 // pred_check
    _
  $region7: #{disc_block_forward.3} parent=0 // pred_check_branch
    %12 = sbr.rel (0) target = $region9
  $region8: #{disc_block_forward.3} parent=0 // pred_region
    _
  $region9: #{disc_block_forward.3} parent=0 // pred_fallthru
    _
  // Predicated region
  $region10: #{disc_block_forward.3} parent=0 // pred_check
    _
  $region11: #{disc_block_forward.3} parent=0 // pred_check_branch
    %14 = sbr.rel (0) target = $region13
  $region12: #{disc_block_forward.3} parent=0 // pred_region
    _
  $region13: #{disc_block_forward.3} parent=0 // pred_fallthru
    _
  // Predicated region
  $region14: #{disc_block_forward.3} parent=0 // pred_check
    _
  $region15: #{disc_block_forward.3} parent=0 // pred_check_branch
    %16 = sbr.rel (0) target = $region17
  $region16: #{disc_block_forward.3} parent=0 // pred_region
    _
  $region17: #{disc_block_forward.3} parent=0 // pred_fallthru
    _
  %v18 = vld [vmem:[%s0] sm:$0xf]
  %v19 = vld [vmem:[%s0 + $0x4] sm:$0xf]
  %v20 = vld [vmem:[%s0 + $0x8] sm:$0xf]
  %v21 = vld [vmem:[%s0 + $0xc] sm:$0xf]
  %v22 = vld [vmem:[%s0 + $0x10] sm:$0xf]
  %v23 = vld [vmem:[%s0 + $0x14] sm:$0xf]
  %v24 = vld [vmem:[%s0 + $0x18] sm:$0xf]
  %v25 = vld [vmem:[%s0 + $0x1c] sm:$0xf]
  %v26 = vld [vmem:[%s0 + $0x20] sm:$0xf]
  %v27 = vld [vmem:[%s0 + $0x24] sm:$0xf]
  %v28 = vld [vmem:[%s0 + $0x28] sm:$0xf]
  %v29 = vld [vmem:[%s0 + $0x2c] sm:$0xf]
  %v30 = vld [vmem:[%s0 + $0x30] sm:$0xf]
  %v31 = vld [vmem:[%s0 + $0x34] sm:$0xf]
  %v32 = vld [vmem:[%s0 + $0x38] sm:$0xf]
  %v33 = vld [vmem:[%s0 + $0x3c] sm:$0xf]
  %v34 = vld [vmem:[%s1] sm:$0xf]
  %v35 = vld [vmem:[%s1 + $0x4] sm:$0xf]
  %v36 = vld [vmem:[%s1 + $0x8] sm:$0xf]
  %v37 = vld [vmem:[%s1 + $0xc] sm:$0xf]
  %v38 = vld [vmem:[%s1 + $0x10] sm:$0xf]
  %v39 = vld [vmem:[%s1 + $0x14] sm:$0xf]
  %v40 = vld [vmem:[%s1 + $0x18] sm:$0xf]
  %v41 = vld [vmem:[%s1 + $0x1c] sm:$0xf]
  %v58 = vunpack.c.l.b16 %v18
  %v59 = vunpack.c.l.b16 %v19
  %v60 = vunpack.c.l.b16 %v20
  %v61 = vunpack.c.l.b16 %v21
  %v62 = vunpack.c.l.b16 %v22
  %v63 = vunpack.c.l.b16 %v23
  %v64 = vunpack.c.l.b16 %v24
  %v65 = vunpack.c.l.b16 %v25
  %v66 = vunpack.c.l.b16 %v26
  %v67 = vunpack.c.l.b16 %v27
  %v68 = vunpack.c.l.b16 %v28
  %v69 = vunpack.c.l.b16 %v29
  %v70 = vunpack.c.l.b16 %v30
  %v71 = vunpack.c.l.b16 %v31
  %v72 = vunpack.c.l.b16 %v32
  %v73 = vunpack.c.l.b16 %v33
  %v74 = vpack.c.b16 %v59, %v58
  %v75 = vpack.c.b16 %v61, %v60
  %v76 = vpack.c.b16 %v63, %v62
  %v77 = vpack.c.b16 %v65, %v64
  %v78 = vpack.c.b16 %v67, %v66
  %v79 = vpack.c.b16 %v69, %v68
  %v80 = vpack.c.b16 %v71, %v70
  %v81 = vpack.c.b16 %v73, %v72
  %v90 = vunpack.c.l.b16 %v34
  %v91 = vunpack.c.l.b16 %v35
  %v92 = vunpack.c.l.b16 %v36
  %v93 = vunpack.c.l.b16 %v37
  %v94 = vunpack.c.l.b16 %v38
  %v95 = vunpack.c.l.b16 %v39
  %v96 = vunpack.c.l.b16 %v40
  %v97 = vunpack.c.l.b16 %v41
  %v98 = vpack.c.b16 %v91, %v90
  %v99 = vpack.c.b16 %v93, %v92
  %v100 = vpack.c.b16 %v95, %v94
  %v101 = vpack.c.b16 %v97, %v96
  %vm106 = vcmask 523264
  %v108 = vsel %vm106, %v74, 0
  %v111 = vsel %vm106, %v75, 0
  %v114 = vsel %vm106, %v76, 0
  %v117 = vsel %vm106, %v77, 0
  %v120 = vsel %vm106, %v78, 0
  %v123 = vsel %vm106, %v79, 0
  %v126 = vsel %vm106, %v80, 0
  %v129 = vsel %vm106, %v81, 0
  %131 = vmatprep.subr.bf16.mxu0 0
  %132 = vmatpush1.bf16.msra.mxu0 %v98
  %133 = vmatprep.subr.bf16.mxu0 0
  %134 = vmatpush1.bf16.msra.mxu0 %v99
  %135 = vmatprep.subr.bf16.mxu0 0
  %136 = vmatpush1.bf16.msra.mxu0 %v100
  %137 = vmatprep.subr.bf16.mxu0 0
  %138 = vmatpush1.bf16.msra.mxu0 %v101
  %139 = vmatprep.subr.bf16.mxu0 0
  %140 = vmatpush1.bf16.msra.mxu0 0
  %141 = vmatprep.subr.bf16.mxu0 0
  %142 = vmatpush1.bf16.msra.mxu0 0
  %143 = vmatprep.subr.bf16.mxu0 0
  %144 = vmatpush1.bf16.msra.mxu0 0
  %145 = vmatprep.subr.bf16.mxu0 0
  %146 = vmatpush1.bf16.msra.mxu0 0
  %147 = vmatprep.subr.bf16.mxu0 0
  %148 = vmatpush1.bf16.msra.mxu0 0
  %149 = vmatprep.subr.bf16.mxu0 0
  %150 = vmatpush1.bf16.msra.mxu0 0
  %151 = vmatprep.subr.bf16.mxu0 0
  %152 = vmatpush1.bf16.msra.mxu0 0
  %153 = vmatprep.subr.bf16.mxu0 0
  %154 = vmatpush1.bf16.msra.mxu0 0
  %155 = vmatprep.subr.bf16.mxu0 0
  %156 = vmatpush1.bf16.msra.mxu0 0
  %157 = vmatprep.subr.bf16.mxu0 0
  %158 = vmatpush1.bf16.msra.mxu0 0
  %159 = vmatprep.subr.bf16.mxu0 0
  %160 = vmatpush1.bf16.msra.mxu0 0
  %161 = vmatprep.subr.bf16.mxu0 0
  %162 = vmatpush1.bf16.msra.mxu0 0
  %163 = vmatprep.mubr.bf16.mxu0 0
  %164 = vmatmul.mubr.bf16.gmra.mrb[0].mxu0 %v108
  %v165 = vpop.f32.mrb[0].mxu0
  %v166 = vadd.f32 0.0, %v165
  %v167 = vpop.f32.mrb[0].mxu0
  %v168 = vpop.f32.mrb[0].mxu0
  %v169 = vadd.f32 0.0, %v168
  %v170 = vpop.f32.mrb[0].mxu0
  %171 = vmatprep.mubr.bf16.mxu0 0
  %172 = vmatmul.mubr.bf16.gmra.mrb[0].mxu0 %v111
  %v173 = vpop.f32.mrb[0].mxu0
  %v174 = vadd.f32 0.0, %v173
  %v175 = vpop.f32.mrb[0].mxu0
  %v176 = vpop.f32.mrb[0].mxu0
  %v177 = vadd.f32 0.0, %v176
  %v178 = vpop.f32.mrb[0].mxu0
  %179 = vmatprep.mubr.bf16.mxu0 0
  %180 = vmatmul.mubr.bf16.gmra.mrb[0].mxu0 %v114
  %v181 = vpop.f32.mrb[0].mxu0
  %v182 = vadd.f32 0.0, %v181
  %v183 = vpop.f32.mrb[0].mxu0
  %v184 = vpop.f32.mrb[0].mxu0
  %v185 = vadd.f32 0.0, %v184
  %v186 = vpop.f32.mrb[0].mxu0
  %187 = vmatprep.mubr.bf16.mxu0 0
  %188 = vmatmul.mubr.bf16.gmra.mrb[0].mxu0 %v117
  %v189 = vpop.f32.mrb[0].mxu0
  %v190 = vadd.f32 0.0, %v189
  %v191 = vpop.f32.mrb[0].mxu0
  %v192 = vpop.f32.mrb[0].mxu0
  %v193 = vadd.f32 0.0, %v192
  %v194 = vpop.f32.mrb[0].mxu0
  %195 = vmatprep.mubr.bf16.mxu0 0
  %196 = vmatmul.mubr.bf16.gmra.mrb[0].mxu0 %v120
  %v197 = vpop.f32.mrb[0].mxu0
  %v198 = vadd.f32 0.0, %v197
  %v199 = vpop.f32.mrb[0].mxu0
  %v200 = vpop.f32.mrb[0].mxu0
  %v201 = vadd.f32 0.0, %v200
  %v202 = vpop.f32.mrb[0].mxu0
  %203 = vmatprep.mubr.bf16.mxu0 0
  %204 = vmatmul.mubr.bf16.gmra.mrb[0].mxu0 %v123
  %v205 = vpop.f32.mrb[0].mxu0
  %v206 = vadd.f32 0.0, %v205
  %v207 = vpop.f32.mrb[0].mxu0
  %v208 = vpop.f32.mrb[0].mxu0
  %v209 = vadd.f32 0.0, %v208
  %v210 = vpop.f32.mrb[0].mxu0
  %211 = vmatprep.mubr.bf16.mxu0 0
  %212 = vmatmul.mubr.bf16.gmra.mrb[0].mxu0 %v126
  %v213 = vpop.f32.mrb[0].mxu0
  %v214 = vadd.f32 0.0, %v213
  %v215 = vpop.f32.mrb[0].mxu0
  %v216 = vpop.f32.mrb[0].mxu0
  %v217 = vadd.f32 0.0, %v216
  %v218 = vpop.f32.mrb[0].mxu0
  %219 = vmatprep.mubr.bf16.mxu0 0
  %220 = vmatmul.mubr.bf16.gmra.mrb[0].mxu0 %v129
  %v221 = vpop.f32.mrb[0].mxu0
  %v222 = vadd.f32 0.0, %v221
  %v223 = vpop.f32.mrb[0].mxu0
  %v224 = vpop.f32.mrb[0].mxu0
  %v225 = vadd.f32 0.0, %v224
  %v226 = vpop.f32.mrb[0].mxu0
  %227 = vdwg.mxu0
  %v228 = vld [vmem:[%s2] sm:$0x1]
  %v230 = vlaneseq
  %v231 = vshrl.u32 %v230, 7
  %v232 = vsub.s32 0, %v231
  %v233 = vrot.slane %v228, %v232
  %v235 = vmul.f32 %v166, %v233
  %v236 = vmul.f32 %v169, %v233
  %v237 = vmul.f32 %v174, %v233
  %v238 = vmul.f32 %v177, %v233
  %v239 = vmul.f32 %v182, %v233
  %v240 = vmul.f32 %v185, %v233
  %v241 = vmul.f32 %v190, %v233
  %v242 = vmul.f32 %v193, %v233
  %v243 = vmul.f32 %v198, %v233
  %v244 = vmul.f32 %v201, %v233
  %v245 = vmul.f32 %v206, %v233
  %v246 = vmul.f32 %v209, %v233
  %v247 = vmul.f32 %v214, %v233
  %v248 = vmul.f32 %v217, %v233
  %v249 = vmul.f32 %v222, %v233
  %v250 = vmul.f32 %v225, %v233
  %v251 = vld [vmem:[%s3] sm:$0x1]
  %v253 = vlaneseq
  %v254 = vshrl.u32 %v253, 7
  %v255 = vsub.s32 0, %v254
  %v256 = vrot.slane %v251, %v255
  %v258 = vadd.f32 %v235, %v256
  %v259 = vadd.f32 %v236, %v256
  %v260 = vadd.f32 %v237, %v256
  %v261 = vadd.f32 %v238, %v256
  %v262 = vadd.f32 %v239, %v256
  %v263 = vadd.f32 %v240, %v256
  %v264 = vadd.f32 %v241, %v256
  %v265 = vadd.f32 %v242, %v256
  %v266 = vadd.f32 %v243, %v256
  %v267 = vadd.f32 %v244, %v256
  %v268 = vadd.f32 %v245, %v256
  %v269 = vadd.f32 %v246, %v256
  %v270 = vadd.f32 %v247, %v256
  %v271 = vadd.f32 %v248, %v256
  %v272 = vadd.f32 %v249, %v256
  %v273 = vadd.f32 %v250, %v256
  %vm274 = vcmp.gt.f32.partialorder %v258, 0.0
  %vm275 = vcmp.gt.f32.partialorder %v259, 0.0
  %vm276 = vcmp.gt.f32.partialorder %v260, 0.0
  %vm277 = vcmp.gt.f32.partialorder %v261, 0.0
  %vm278 = vcmp.gt.f32.partialorder %v262, 0.0
  %vm279 = vcmp.gt.f32.partialorder %v263, 0.0
  %vm280 = vcmp.gt.f32.partialorder %v264, 0.0
  %vm281 = vcmp.gt.f32.partialorder %v265, 0.0
  %vm282 = vcmp.gt.f32.partialorder %v266, 0.0
  %vm283 = vcmp.gt.f32.partialorder %v267, 0.0
  %vm284 = vcmp.gt.f32.partialorder %v268, 0.0
  %vm285 = vcmp.gt.f32.partialorder %v269, 0.0
  %vm286 = vcmp.gt.f32.partialorder %v270, 0.0
  %vm287 = vcmp.gt.f32.partialorder %v271, 0.0
  %vm288 = vcmp.gt.f32.partialorder %v272, 0.0
  %vm289 = vcmp.gt.f32.partialorder %v273, 0.0
  %v290 = vmul.f32 %v258, 0.2
  %v291 = vmul.f32 %v259, 0.2
  %v292 = vmul.f32 %v260, 0.2
  %v293 = vmul.f32 %v261, 0.2
  %v294 = vmul.f32 %v262, 0.2
  %v295 = vmul.f32 %v263, 0.2
  %v296 = vmul.f32 %v264, 0.2
  %v297 = vmul.f32 %v265, 0.2
  %v298 = vmul.f32 %v266, 0.2
  %v299 = vmul.f32 %v267, 0.2
  %v300 = vmul.f32 %v268, 0.2
  %v301 = vmul.f32 %v269, 0.2
  %v302 = vmul.f32 %v270, 0.2
  %v303 = vmul.f32 %v271, 0.2
  %v304 = vmul.f32 %v272, 0.2
  %v305 = vmul.f32 %v273, 0.2
  %v306 = vsel %vm274, %v258, %v290
  %v307 = vsel %vm275, %v259, %v291
  %v308 = vsel %vm276, %v260, %v292
  %v309 = vsel %vm277, %v261, %v293
  %v310 = vsel %vm278, %v262, %v294
  %v311 = vsel %vm279, %v263, %v295
  %v312 = vsel %vm280, %v264, %v296
  %v313 = vsel %vm281, %v265, %v297
  %v314 = vsel %vm282, %v266, %v298
  %v315 = vsel %vm283, %v267, %v299
  %v316 = vsel %vm284, %v268, %v300
  %v317 = vsel %vm285, %v269, %v301
  %v318 = vsel %vm286, %v270, %v302
  %v319 = vsel %vm287, %v271, %v303
  %v320 = vsel %vm288, %v272, %v304
  %v321 = vsel %vm289, %v273, %v305
  %322 = vst [vmem:[%s4] sm:$0xff] %v306
  %323 = vst [vmem:[%s4 + $0x8] sm:$0xff] %v307
  %324 = vst [vmem:[%s4 + $0x10] sm:$0xff] %v308
  %325 = vst [vmem:[%s4 + $0x18] sm:$0xff] %v309
  %326 = vst [vmem:[%s4 + $0x20] sm:$0xff] %v310
  %327 = vst [vmem:[%s4 + $0x28] sm:$0xff] %v311
  %328 = vst [vmem:[%s4 + $0x30] sm:$0xff] %v312
  %329 = vst [vmem:[%s4 + $0x38] sm:$0xff] %v313
  %330 = vst [vmem:[%s4 + $0x40] sm:$0xff] %v314
  %331 = vst [vmem:[%s4 + $0x48] sm:$0xff] %v315
  %332 = vst [vmem:[%s4 + $0x50] sm:$0xff] %v316
  %333 = vst [vmem:[%s4 + $0x58] sm:$0xff] %v317
  %334 = vst [vmem:[%s4 + $0x60] sm:$0xff] %v318
  %335 = vst [vmem:[%s4 + $0x68] sm:$0xff] %v319
  %336 = vst [vmem:[%s4 + $0x70] sm:$0xff] %v320
  %337 = vst [vmem:[%s4 + $0x78] sm:$0xff] %v321
  // Predicated region
  $region18: #{disc_block_forward.3} parent=0 // pred_check
    _
  $region19: #{disc_block_forward.3} parent=0 // pred_check_branch
    %339 = sbr.rel (0) target = $region21
  $region20: #{disc_block_forward.3} parent=0 // pred_region
    _
  $region21: #{disc_block_forward.3} parent=0 // pred_fallthru
    _
  // Predicated region
  $region22: #{disc_block_forward.3} parent=0 // pred_check
    _
  $region23: #{disc_block_forward.3} parent=0 // pred_check_branch
    %341 = sbr.rel (0) target = $region25
  $region24: #{disc_block_forward.3} parent=0 // pred_region
    _
  $region25: #{disc_block_forward.3} parent=0 // pred_fallthru
    _

// kernel: disc_block_forward.2
$region0: #{disc_block_forward.2}
  #allocation0 [shape = 'u32[]', space=smem, size = 0x4, offset = 0x4, fixed_abs, tag = 'smem constant byte address 0x4 - core index']
  #allocation1 [shape = 'u32[144,128]{1,0:T(1,128)}', space=vmem, size = 0x12000, scoped, tag = 'internal scratch']
  %s0 = inlined_call_operand.vmem [shape: bf16[128,64], index: 0, kind: input, shape index: {}]
  %s1 = inlined_call_operand.vmem [shape: bf16[64,128], index: 1, kind: input, shape index: {}]
  %s2 = inlined_call_operand.vmem [shape: f32[1,2,128], index: 2, kind: output, shape index: {}]
  %s3 = sld [smem:[#allocation0]]
  $region18: #{disc_block_forward.2} parent=0
    _
  %s5 = ssub.s32 1, %s3
  %s6 = scalar_select 0, %s5, %s3
  // Predicated region
  $region2: #{disc_block_forward.2} parent=0 // pred_check
    _
  $region3: #{disc_block_forward.2} parent=0 // pred_check_branch
    %8 = sbr.rel (0) target = $region5
  $region4: #{disc_block_forward.2} parent=0 // pred_region
    _
  $region5: #{disc_block_forward.2} parent=0 // pred_fallthru
    _
  // Predicated region
  $region6: #{disc_block_forward.2} parent=0 // pred_check
    _
  $region7: #{disc_block_forward.2} parent=0 // pred_check_branch
    %10 = sbr.rel (0) target = $region9
  $region8: #{disc_block_forward.2} parent=0 // pred_region
    _
  $region9: #{disc_block_forward.2} parent=0 // pred_fallthru
    _
  %v12 = vld [vmem:[%s0] sm:$0xf]
  %v13 = vld [vmem:[%s0 + $0x4] sm:$0xf]
  %v14 = vld [vmem:[%s0 + $0x8] sm:$0xf]
  %v15 = vld [vmem:[%s0 + $0xc] sm:$0xf]
  %v16 = vld [vmem:[%s0 + $0x10] sm:$0xf]
  %v17 = vld [vmem:[%s0 + $0x14] sm:$0xf]
  %v18 = vld [vmem:[%s0 + $0x18] sm:$0xf]
  %v19 = vld [vmem:[%s0 + $0x1c] sm:$0xf]
  %v20 = vld [vmem:[%s0 + $0x20] sm:$0xf]
  %v21 = vld [vmem:[%s0 + $0x24] sm:$0xf]
  %v22 = vld [vmem:[%s0 + $0x28] sm:$0xf]
  %v23 = vld [vmem:[%s0 + $0x2c] sm:$0xf]
  %v24 = vld [vmem:[%s0 + $0x30] sm:$0xf]
  %v25 = vld [vmem:[%s0 + $0x34] sm:$0xf]
  %v26 = vld [vmem:[%s0 + $0x38] sm:$0xf]
  %v27 = vld [vmem:[%s0 + $0x3c] sm:$0xf]
  %v28 = vld [vmem:[%s1] sm:$0xf]
  %v29 = vld [vmem:[%s1 + $0x4] sm:$0xf]
  %v30 = vld [vmem:[%s1 + $0x8] sm:$0xf]
  %v31 = vld [vmem:[%s1 + $0xc] sm:$0xf]
  %v32 = vld [vmem:[%s1 + $0x10] sm:$0xf]
  %v33 = vld [vmem:[%s1 + $0x14] sm:$0xf]
  %v34 = vld [vmem:[%s1 + $0x18] sm:$0xf]
  %v35 = vld [vmem:[%s1 + $0x1c] sm:$0xf]
  %v52 = vunpack.c.l.b16 %v12
  %v53 = vunpack.c.l.b16 %v13
  %v54 = vunpack.c.l.b16 %v14
  %v55 = vunpack.c.l.b16 %v15
  %v56 = vunpack.c.l.b16 %v16
  %v57 = vunpack.c.l.b16 %v17
  %v58 = vunpack.c.l.b16 %v18
  %v59 = vunpack.c.l.b16 %v19
  %v60 = vunpack.c.l.b16 %v20
  %v61 = vunpack.c.l.b16 %v21
  %v62 = vunpack.c.l.b16 %v22
  %v63 = vunpack.c.l.b16 %v23
  %v64 = vunpack.c.l.b16 %v24
  %v65 = vunpack.c.l.b16 %v25
  %v66 = vunpack.c.l.b16 %v26
  %v67 = vunpack.c.l.b16 %v27
  %v68 = vpack.c.b16 %v53, %v52
  %v69 = vpack.c.b16 %v55, %v54
  %v70 = vpack.c.b16 %v57, %v56
  %v71 = vpack.c.b16 %v59, %v58
  %v72 = vpack.c.b16 %v61, %v60
  %v73 = vpack.c.b16 %v63, %v62
  %v74 = vpack.c.b16 %v65, %v64
  %v75 = vpack.c.b16 %v67, %v66
  %v84 = vunpack.c.l.b16 %v28
  %v85 = vunpack.c.l.b16 %v29
  %v86 = vunpack.c.l.b16 %v30
  %v87 = vunpack.c.l.b16 %v31
  %v88 = vunpack.c.l.b16 %v32
  %v89 = vunpack.c.l.b16 %v33
  %v90 = vunpack.c.l.b16 %v34
  %v91 = vunpack.c.l.b16 %v35
  %v92 = vpack.c.b16 %v85, %v84
  %v93 = vpack.c.b16 %v87, %v86
  %v94 = vpack.c.b16 %v89, %v88
  %v95 = vpack.c.b16 %v91, %v90
  %vm100 = vcmask 523264
  %v102 = vsel %vm100, %v68, 0
  %v105 = vsel %vm100, %v69, 0
  %v108 = vsel %vm100, %v70, 0
  %v111 = vsel %vm100, %v71, 0
  %v114 = vsel %vm100, %v72, 0
  %v117 = vsel %vm100, %v73, 0
  %v120 = vsel %vm100, %v74, 0
  %v123 = vsel %vm100, %v75, 0
  %125 = vmatprep.subr.bf16.mxu0 0
  %126 = vmatpush1.bf16.msra.mxu0 %v92
  %127 = vmatprep.subr.bf16.mxu0 0
  %128 = vmatpush1.bf16.msra.mxu0 %v93
  %129 = vmatprep.subr.bf16.mxu0 0
  %130 = vmatpush1.bf16.msra.mxu0 %v94
  %131 = vmatprep.subr.bf16.mxu0 0
  %132 = vmatpush1.bf16.msra.mxu0 %v95
  %133 = vmatprep.subr.bf16.mxu0 0
  %134 = vmatpush1.bf16.msra.mxu0 0
  %135 = vmatprep.subr.bf16.mxu0 0
  %136 = vmatpush1.bf16.msra.mxu0 0
  %137 = vmatprep.subr.bf16.mxu0 0
  %138 = vmatpush1.bf16.msra.mxu0 0
  %139 = vmatprep.subr.bf16.mxu0 0
  %140 = vmatpush1.bf16.msra.mxu0 0
  %141 = vmatprep.subr.bf16.mxu0 0
  %142 = vmatpush1.bf16.msra.mxu0 0
  %143 = vmatprep.subr.bf16.mxu0 0
  %144 = vmatpush1.bf16.msra.mxu0 0
  %145 = vmatprep.subr.bf16.mxu0 0
  %146 = vmatpush1.bf16.msra.mxu0 0
  %147 = vmatprep.subr.bf16.mxu0 0
  %148 = vmatpush1.bf16.msra.mxu0 0
  %149 = vmatprep.subr.bf16.mxu0 0
  %150 = vmatpush1.bf16.msra.mxu0 0
  %151 = vmatprep.subr.bf16.mxu0 0
  %152 = vmatpush1.bf16.msra.mxu0 0
  %153 = vmatprep.subr.bf16.mxu0 0
  %154 = vmatpush1.bf16.msra.mxu0 0
  %155 = vmatprep.subr.bf16.mxu0 0
  %156 = vmatpush1.bf16.msra.mxu0 0
  %157 = vmatprep.mubr.bf16.mxu0 0
  %158 = vmatmul.mubr.bf16.gmra.mrb[0].mxu0 %v102
  %v159 = vpop.f32.mrb[0].mxu0
  %v160 = vadd.f32 0.0, %v159
  %v161 = vpop.f32.mrb[0].mxu0
  %v162 = vpop.f32.mrb[0].mxu0
  %v163 = vadd.f32 0.0, %v162
  %v164 = vpop.f32.mrb[0].mxu0
  %165 = vmatprep.mubr.bf16.mxu0 0
  %166 = vmatmul.mubr.bf16.gmra.mrb[0].mxu0 %v105
  %v167 = vpop.f32.mrb[0].mxu0
  %v168 = vadd.f32 0.0, %v167
  %v169 = vpop.f32.mrb[0].mxu0
  %v170 = vpop.f32.mrb[0].mxu0
  %v171 = vadd.f32 0.0, %v170
  %v172 = vpop.f32.mrb[0].mxu0
  %173 = vmatprep.mubr.bf16.mxu0 0
  %174 = vmatmul.mubr.bf16.gmra.mrb[0].mxu0 %v108
  %v175 = vpop.f32.mrb[0].mxu0
  %v176 = vadd.f32 0.0, %v175
  %v177 = vpop.f32.mrb[0].mxu0
  %v178 = vpop.f32.mrb[0].mxu0
  %v179 = vadd.f32 0.0, %v178
  %v180 = vpop.f32.mrb[0].mxu0
  %181 = vmatprep.mubr.bf16.mxu0 0
  %182 = vmatmul.mubr.bf16.gmra.mrb[0].mxu0 %v111
  %v183 = vpop.f32.mrb[0].mxu0
  %v184 = vadd.f32 0.0, %v183
  %v185 = vpop.f32.mrb[0].mxu0
  %v186 = vpop.f32.mrb[0].mxu0
  %v187 = vadd.f32 0.0, %v186
  %v188 = vpop.f32.mrb[0].mxu0
  %189 = vmatprep.mubr.bf16.mxu0 0
  %190 = vmatmul.mubr.bf16.gmra.mrb[0].mxu0 %v114
  %v191 = vpop.f32.mrb[0].mxu0
  %v192 = vadd.f32 0.0, %v191
  %v193 = vpop.f32.mrb[0].mxu0
  %v194 = vpop.f32.mrb[0].mxu0
  %v195 = vadd.f32 0.0, %v194
  %v196 = vpop.f32.mrb[0].mxu0
  %197 = vmatprep.mubr.bf16.mxu0 0
  %198 = vmatmul.mubr.bf16.gmra.mrb[0].mxu0 %v117
  %v199 = vpop.f32.mrb[0].mxu0
  %v200 = vadd.f32 0.0, %v199
  %v201 = vpop.f32.mrb[0].mxu0
  %v202 = vpop.f32.mrb[0].mxu0
  %v203 = vadd.f32 0.0, %v202
  %v204 = vpop.f32.mrb[0].mxu0
  %205 = vmatprep.mubr.bf16.mxu0 0
  %206 = vmatmul.mubr.bf16.gmra.mrb[0].mxu0 %v120
  %v207 = vpop.f32.mrb[0].mxu0
  %v208 = vadd.f32 0.0, %v207
  %v209 = vpop.f32.mrb[0].mxu0
  %v210 = vpop.f32.mrb[0].mxu0
  %v211 = vadd.f32 0.0, %v210
  %v212 = vpop.f32.mrb[0].mxu0
  %213 = vmatprep.mubr.bf16.mxu0 0
  %214 = vmatmul.mubr.bf16.gmra.mrb[0].mxu0 %v123
  %v215 = vpop.f32.mrb[0].mxu0
  %v216 = vadd.f32 0.0, %v215
  %v217 = vpop.f32.mrb[0].mxu0
  %v218 = vpop.f32.mrb[0].mxu0
  %v219 = vadd.f32 0.0, %v218
  %v220 = vpop.f32.mrb[0].mxu0
  %221 = vdwg.mxu0
  %v222 = vadd.f32 %v160, %v163
  %v223 = vadd.f32 %v222, %v168
  %v224 = vadd.f32 %v223, %v171
  %v225 = vadd.f32 %v224, %v176
  %v226 = vadd.f32 %v225, %v179
  %v227 = vadd.f32 %v226, %v184
  %v228 = vadd.f32 %v227, %v187
  %v229 = vadd.f32 %v228, %v192
  %v230 = vadd.f32 %v229, %v195
  %v231 = vadd.f32 %v230, %v200
  %v232 = vadd.f32 %v231, %v203
  %v233 = vadd.f32 %v232, %v208
  %v234 = vadd.f32 %v233, %v211
  %v235 = vadd.f32 %v234, %v216
  %v236 = vadd.f32 %v235, %v219
  %v237 = vrot.slane %v236, 4
  %v238 = vadd.f32 %v236, %v237
  %v239 = vrot.slane %v238, 2
  %v240 = vadd.f32 %v238, %v239
  %v241 = vrot.slane %v240, 1
  %v242 = vadd.f32 %v240, %v241
  %v243 = vmul.f32 %v160, %v160
  %v244 = vmul.f32 %v163, %v163
  %v245 = vmul.f32 %v168, %v168
  %v246 = vmul.f32 %v171, %v171
  %v247 = vmul.f32 %v176, %v176
  %v248 = vmul.f32 %v179, %v179
  %v249 = vmul.f32 %v184, %v184
  %v250 = vmul.f32 %v187, %v187
  %v251 = vmul.f32 %v192, %v192
  %v252 = vmul.f32 %v195, %v195
  %v253 = vmul.f32 %v200, %v200
  %v254 = vmul.f32 %v203, %v203
  %v255 = vmul.f32 %v208, %v208
  %v256 = vmul.f32 %v211, %v211
  %v257 = vmul.f32 %v216, %v216
  %v258 = vmul.f32 %v219, %v219
  %v259 = vadd.f32 %v243, %v244
  %v260 = vadd.f32 %v259, %v245
  %v261 = vadd.f32 %v260, %v246
  %v262 = vadd.f32 %v261, %v247
  %v263 = vadd.f32 %v262, %v248
  %v264 = vadd.f32 %v263, %v249
  %v265 = vadd.f32 %v264, %v250
  %v266 = vadd.f32 %v265, %v251
  %v267 = vadd.f32 %v266, %v252
  %v268 = vadd.f32 %v267, %v253
  %v269 = vadd.f32 %v268, %v254
  %v270 = vadd.f32 %v269, %v255
  %v271 = vadd.f32 %v270, %v256
  %v272 = vadd.f32 %v271, %v257
  %v273 = vadd.f32 %v272, %v258
  %v274 = vrot.slane %v273, 4
  %v275 = vadd.f32 %v273, %v274
  %v276 = vrot.slane %v275, 2
  %v277 = vadd.f32 %v275, %v276
  %v278 = vrot.slane %v277, 1
  %v279 = vadd.f32 %v277, %v278
  %vm280 = vcmask 1040384
  %v281 = vsel %vm280, %v242, %v279
  %282 = vst [vmem:[%s2] sm:$0x3] %v281
  // Predicated region
  $region10: #{disc_block_forward.2} parent=0 // pred_check
    _
  $region11: #{disc_block_forward.2} parent=0 // pred_check_branch
    %284 = sbr.rel (0) target = $region13
  $region12: #{disc_block_forward.2} parent=0 // pred_region
    _
  $region13: #{disc_block_forward.2} parent=0 // pred_fallthru
    _
  // Predicated region
  $region14: #{disc_block_forward.2} parent=0 // pred_check
    _
  $region15: #{disc_block_forward.2} parent=0 // pred_check_branch
    %286 = sbr.rel (0) target = $region17
  $region16: #{disc_block_forward.2} parent=0 // pred_region
    _
  $region17: #{disc_block_forward.2} parent=0 // pred_fallthru
    _

</llo_original>
